<compile_context>
chip_gen: v7x
topology: tpu7x:2x2x1
jax: 0.10.0
libtpu: 0.0.40
codegen_flags: <defaults>
</compile_context>

<pallas_src>
import math
import functools

import jax
import jax.numpy as jnp
from jax import lax
from jax.experimental import pallas as pl
from jax.experimental.pallas import tpu as pltpu


# ---------------------------------------------------------------------------
# In-kernel math helpers (f32 on VPU/EUP; matmuls go to the MXU)
# ---------------------------------------------------------------------------
def _layer_norm(x, gamma, beta, eps):
    mean = jnp.mean(x, axis=-1, keepdims=True)
    var = jnp.mean(jnp.square(x - mean), axis=-1, keepdims=True)
    return (x - mean) * lax.rsqrt(var + eps) * gamma + beta


def _softmax(x):
    m = jnp.max(x, axis=-1, keepdims=True)
    e = jnp.exp(x - m)
    # EUP reciprocal instead of a VALU divide (free relative to VALU slot).
    return e * pl.reciprocal(jnp.sum(e, axis=-1, keepdims=True), approx=True)


def _erf(x):
    # Abramowitz & Stegun 7.1.26 rational approximation (max abs err ~1.5e-7,
    # i.e. at f32 resolution).  Used because lax.erf may not lower in Mosaic.
    a1, a2, a3, a4, a5 = (0.254829592, -0.284496736, 1.421413741,
                          -1.453152027, 1.061405429)
    p = 0.3275911
    s = jnp.sign(x)
    ax = jnp.abs(x)
    t = 1.0 / (1.0 + p * ax)
    poly = ((((a5 * t + a4) * t + a3) * t + a2) * t + a1) * t
    return s * (1.0 - poly * jnp.exp(-ax * ax))


def _gelu_erf(x):
    # x * 0.5 * (1 + erf(x / sqrt(2)))  -- exact (erf-based) GELU of the module
    return x * 0.5 * (1.0 + _erf(x * (1.0 / math.sqrt(2.0))))


def _const_spec(shape):
    zeros = (0,) * len(shape)
    return pl.BlockSpec(shape, lambda b, _z=zeros: _z)


# ---------------------------------------------------------------------------
# One-shot kernel: batch-invariant positional bias  softmax(pq @ pk^T)
# (runs once, not once per batch element)
# ---------------------------------------------------------------------------
def _pos_bias_kernel(n_heads, head_dim, ln_eps,
                     pos_ref, wpqk_ref, bpqk_ref, g_ref, b_ref, out_ref):
    S, H = pos_ref.shape
    pos_ln = _layer_norm(pos_ref[...], g_ref[...], b_ref[...], ln_eps)
    pqk = jnp.dot(pos_ln, wpqk_ref[...],
                  preferred_element_type=jnp.float32) + bpqk_ref[...]

    def split(t):  # [S, H] -> [n_heads, S, head_dim]
        return jnp.transpose(t.reshape(S, n_heads, head_dim), (1, 0, 2))

    pq = split(pqk[:, :H])        # pos_scaling / sqrt(dh) folded into wpq/bpq
    pk = split(pqk[:, H:])
    scores = jnp.einsum('hqd,hkd->hqk', pq, pk,
                        preferred_element_type=jnp.float32)
    out_ref[...] = _softmax(scores).astype(out_ref.dtype)


# ---------------------------------------------------------------------------
# Main kernel: one LightTransformerLayer forward per batch element
# ---------------------------------------------------------------------------
def _light_layer_kernel(n_heads, head_dim, ln_eps,
                        x_ref, mask_ref, pos_bias_ref,
                        wqkv_ref, bqkv_ref, wd_ref, bd_ref,
                        aln_g_ref, aln_b_ref,
                        w1_ref, b1_ref, w2_ref, b2_ref,
                        fln_g_ref, fln_b_ref,
                        out_ref, item_ref):
    S, H = x_ref.shape[1], x_ref.shape[2]
    mm_dtype = wqkv_ref.dtype            # MXU operand dtype (bf16 by default)

    x = x_ref[0]                         # [S, H]  f32
    mask = mask_ref[0]                   # [S, S]  f32 additive mask

    def mm(a, w_ref, b_ref):             # MXU matmul, f32 accumulation
        return jnp.dot(a.astype(mm_dtype), w_ref[...],
                       preferred_element_type=jnp.float32) + b_ref[...]

    def split_heads(t):                  # [S, H] -> [n_heads, S, head_dim]
        return jnp.transpose(t.reshape(S, n_heads, head_dim), (1, 0, 2))

    def merge_heads(t):                  # [n_heads, S, head_dim] -> [S, H]
        return jnp.transpose(t, (1, 0, 2)).reshape(S, H)

    # --- fused Q/K/V projection (1/sqrt(dh) pre-folded into wq/bq) ----------
    qkv = mm(x, wqkv_ref, bqkv_ref)      # [S, 3H] f32
    q = split_heads(qkv[:, 0 * H:1 * H]).astype(mm_dtype)
    k = split_heads(qkv[:, 1 * H:2 * H]).astype(mm_dtype)
    v = split_heads(qkv[:, 2 * H:3 * H]).astype(mm_dtype)

    # --- head-batched item attention -----------------------------------------
    scores = jnp.einsum('hqd,hkd->hqk', q, k,
                        preferred_element_type=jnp.float32) + mask[None]
    probs = _softmax(scores)                                  # f32 (attn_dropout = eval identity)
    ctx_item = jnp.einsum('hqk,hkd->hqd', probs.astype(mm_dtype), v,
                          preferred_element_type=jnp.float32)  # [nh, S, dh]

    # --- precomputed (batch-invariant) positional bias @ V -------------------
    ctx_pos = jnp.einsum('hqk,hkd->hqd', pos_bias_ref[...], v,
                         preferred_element_type=jnp.float32)   # [nh, S, dh]

    item_ref[0] = merge_heads(ctx_item)                        # context_layer_item
    context = merge_heads(ctx_item + ctx_pos)                  # [S, H] f32

    # --- output projection + residual + LayerNorm (out_dropout = identity) ---
    attn = mm(context, wd_ref, bd_ref)
    attn = _layer_norm(attn + x, aln_g_ref[...], aln_b_ref[...], ln_eps)

    # --- feed forward (erf-GELU) + residual + LayerNorm (dropout = identity) -
    hidden = _gelu_erf(mm(attn, w1_ref, b1_ref))
    hidden = mm(hidden, w2_ref, b2_ref)
    out_ref[0] = _layer_norm(hidden + attn,
                             fln_g_ref[...], fln_b_ref[...], ln_eps)


# ---------------------------------------------------------------------------
# Wrapper
# ---------------------------------------------------------------------------
def light_transformer_layer(x, mask, pos_emb, params, *, n_heads,
                            layer_norm_eps=1e-12, matmul_dtype=jnp.bfloat16):
    x = jnp.asarray(x, jnp.float32)
    B, S, H = x.shape
    I = params['w1'].shape[1]
    head_dim = H // n_heads
    mm_dtype = jnp.dtype(matmul_dtype)

    f32 = lambda a: jnp.asarray(a, jnp.float32)

    # ---- normalize the additive mask to [Bm, S, S] --------------------------
    mask = f32(mask)
    if mask.ndim == 4:
        mask = mask[:, 0]
    elif mask.ndim == 2:
        mask = mask[None]
    Bm = mask.shape[0]
    if Bm not in (1, B):
        raise ValueError("mask leading dim must be 1 (shared) or B (per-batch)")
    # Shared mask (Bm == 1): constant index_map -> DMA'd once, VMEM-resident.
    mask_map = (lambda b: (0, 0, 0)) if Bm == 1 else (lambda b: (b, 0, 0))

    # ---- fold scale factors into weights, fuse projections, cast to bf16 ----
    inv_sqrt_d = 1.0 / math.sqrt(head_dim)
    pos_scale = float(head_dim * 2) ** (-0.5) * inv_sqrt_d   # attn_scale_factor = 2
    wqkv = jnp.concatenate([f32(params['wq']) * inv_sqrt_d,
                            f32(params['wk']), f32(params['wv'])],
                           axis=1).astype(mm_dtype)           # [H, 3H]
    bqkv = jnp.concatenate([f32(params['bq']) * inv_sqrt_d,
                            f32(params['bk']), f32(params['bv'])], axis=1)
    wpqk = jnp.concatenate([f32(params['wpq']) * pos_scale,
                            f32(params['wpk'])], axis=1)      # [H, 2H] (one-shot, f32)
    bpqk = jnp.concatenate([f32(params['bpq']) * pos_scale,
                            f32(params['bpk'])], axis=1)

    wd = f32(params['wd']).astype(mm_dtype); bd = f32(params['bd'])
    w1 = f32(params['w1']).astype(mm_dtype); b1 = f32(params['b1'])
    w2 = f32(params['w2']).astype(mm_dtype); b2 = f32(params['b2'])
    aln_g, aln_b = f32(params['aln_g']), f32(params['aln_b'])
    fln_g, fln_b = f32(params['fln_g']), f32(params['fln_b'])
    pln_g, pln_b = f32(params['pln_g']), f32(params['pln_b'])
    pos_emb = f32(pos_emb)

    # ---- one-shot positional bias [n_heads, S, S] ----------------------------
    pos_bias = pl.pallas_call(
        functools.partial(_pos_bias_kernel, n_heads, head_dim, layer_norm_eps),
        out_shape=jax.ShapeDtypeStruct((n_heads, S, S), mm_dtype),
        grid_spec=pltpu.PrefetchScalarGridSpec(
            num_scalar_prefetch=0, grid=(1,),
            in_specs=[_const_spec((S, H)), _const_spec((H, 2 * H)),
                      _const_spec((1, 2 * H)), _const_spec((1, H)),
                      _const_spec((1, H))],
            out_specs=_const_spec((n_heads, S, S))),
        compiler_params=pltpu.CompilerParams(
            dimension_semantics=("arbitrary",)),
    )(pos_emb, wpqk, bpqk, pln_g, pln_b)

    # ---- main per-batch kernel ------------------------------------------------
    in_specs = [
        pl.BlockSpec((1, S, H), lambda b: (b, 0, 0)),       # x
        pl.BlockSpec((1, S, S), mask_map),                  # additive mask
        _const_spec((n_heads, S, S)),                       # pos_bias (resident)
        _const_spec((H, 3 * H)), _const_spec((1, 3 * H)),   # fused QKV
        _const_spec((H, H)), _const_spec((1, H)),           # attn output dense
        _const_spec((1, H)), _const_spec((1, H)),           # attn LayerNorm
        _const_spec((H, I)), _const_spec((1, I)),           # FFN dense_1
        _const_spec((I, H)), _const_spec((1, H)),           # FFN dense_2
        _const_spec((1, H)), _const_spec((1, H)),           # FFN LayerNorm
    ]
    out_specs = [pl.BlockSpec((1, S, H), lambda b: (b, 0, 0)),
                 pl.BlockSpec((1, S, H), lambda b: (b, 0, 0))]
    out_shape = [jax.ShapeDtypeStruct((B, S, H), jnp.float32),
                 jax.ShapeDtypeStruct((B, S, H), jnp.float32)]

    # ---- advisory cost estimate + explicit VMEM budget ------------------------
    flops = int(2 * B * S * H * (4 * H + 2 * I)
                + 6 * B * n_heads * S * S * head_dim)
    transcendentals = int(B * S * (I + n_heads * S))
    weight_bytes = sum(int(a.size) * a.dtype.itemsize for a in
                       (wqkv, bqkv, wd, bd, w1, b1, w2, b2,
                        aln_g, aln_b, fln_g, fln_b, pos_bias))
    bytes_accessed = int(4 * (x.size + mask.size + 2 * B * S * H) + weight_bytes)

    # TODO(synk): for production S (>=512) add a query-tile grid axis with an
    # online-softmax so the [n_heads,S,S] scores/pos_bias never fully
    # materialize (needed under v7x's 64 MiB VMEM), and stream w1/w2 from HBM
    # (memory_space=pl.ANY + manual DMA) when H*I no longer fits residently.
    temp_bytes = 4 * (4 * S * H + 3 * n_heads * S * S + 2 * S * I)
    est = weight_bytes + 2 * 4 * (3 * S * H + S * S) + temp_bytes
    vmem_limit = int(min(max(2 * est, 32 * 1024 * 1024), 56 * 1024 * 1024))

    ff_out, item_out = pl.pallas_call(
        functools.partial(_light_layer_kernel, n_heads, head_dim, layer_norm_eps),
        out_shape=out_shape,
        grid_spec=pltpu.PrefetchScalarGridSpec(
            num_scalar_prefetch=0, grid=(B,),
            in_specs=in_specs, out_specs=out_specs),
        compiler_params=pltpu.CompilerParams(
            dimension_semantics=("parallel",),
            vmem_limit_bytes=vmem_limit),
        cost_estimate=pl.CostEstimate(flops=flops,
                                      transcendentals=transcendentals,
                                      bytes_accessed=bytes_accessed),
    )(x, mask, pos_bias,
      wqkv, bqkv, wd, bd, aln_g, aln_b,
      w1, b1, w2, b2, fln_g, fln_b)
    return ff_out, item_out


# ---------------------------------------------------------------------------
if __name__ == "__main__":
    B, S, H, I = 2, 8, 32, 64
    n_heads = 2
    eps = 1e-12

    key = jax.random.PRNGKey(0)
    ks = jax.random.split(key, 20)

    def w(k, shape, scale=0.02):
        return (scale * jax.random.normal(k, shape)).astype(jnp.float32)

    params = dict(
        wq=w(ks[0], (H, H)), bq=w(ks[1], (1, H)),
        wk=w(ks[2], (H, H)), bk=w(ks[3], (1, H)),
        wv=w(ks[4], (H, H)), bv=w(ks[5], (1, H)),
        wpq=w(ks[6], (H, H)), bpq=w(ks[7], (1, H)),
        wpk=w(ks[8], (H, H)), bpk=w(ks[9], (1, H)),
        pln_g=jnp.ones((1, H), jnp.float32), pln_b=jnp.zeros((1, H), jnp.float32),
        wd=w(ks[10], (H, H)), bd=w(ks[11], (1, H)),
        aln_g=jnp.ones((1, H), jnp.float32), aln_b=jnp.zeros((1, H), jnp.float32),
        w1=w(ks[12], (H, I)), b1=w(ks[13], (1, I)),
        w2=w(ks[14], (I, H)), b2=w(ks[15], (1, H)),
        fln_g=jnp.ones((1, H), jnp.float32), fln_b=jnp.zeros((1, H), jnp.float32),
    )

    x = jax.random.normal(ks[16], (B, S, H), dtype=jnp.float32)
    pos_emb = jax.random.normal(ks[17], (S, H), dtype=jnp.float32)
    # Causal additive mask shared across the batch (leading dim 1 -> fetched
    # once and kept VMEM-resident instead of re-DMA'd per batch element).
    causal = jnp.tril(jnp.ones((S, S), jnp.float32))
    mask = ((1.0 - causal) * -10000.0)[None, None].astype(jnp.float32)  # [1,1,S,S]

    ff_out, item_out = light_transformer_layer(
        x, mask, pos_emb, params, n_heads=n_heads, layer_norm_eps=eps)
    jax.block_until_ready((ff_out, item_out))

    assert ff_out.shape == (B, S, H) and item_out.shape == (B, S, H)
    assert bool(jnp.all(jnp.isfinite(ff_out))) and bool(jnp.all(jnp.isfinite(item_out)))
    print("KERNEL_OK")
</pallas_src>

<mosaic_0001>
module attributes {stable_mosaic.version = 11 : i64} {
  func.func @_pos_bias_kernel(%arg0: i32, %arg1: memref<8x32xf32, #tpu.memory_space<vmem>>, %arg2: memref<32x64xf32, #tpu.memory_space<vmem>>, %arg3: memref<1x64xf32, #tpu.memory_space<vmem>>, %arg4: memref<1x32xf32, #tpu.memory_space<vmem>>, %arg5: memref<1x32xf32, #tpu.memory_space<vmem>>, %arg6: memref<2x8x8xbf16, #tpu.memory_space<vmem>>) attributes {dimension_semantics = [#tpu.dimension_semantics<arbitrary>], iteration_bounds = array<i64: 1>, scalar_prefetch = 0 : i64, scratch_operands = 0 : i64, tpu.core_type = #tpu.core_type<tc>, window_params = [{pipeline_mode = #tpu.pipeline_mode<synchronous>, transform_indices = @transform_0, window_bounds = array<i64: 8, 32>}, {pipeline_mode = #tpu.pipeline_mode<synchronous>, transform_indices = @transform_1, window_bounds = array<i64: 32, 64>}, {pipeline_mode = #tpu.pipeline_mode<synchronous>, transform_indices = @transform_2, window_bounds = array<i64: 1, 64>}, {pipeline_mode = #tpu.pipeline_mode<synchronous>, transform_indices = @transform_3, window_bounds = array<i64: 1, 32>}, {pipeline_mode = #tpu.pipeline_mode<synchronous>, transform_indices = @transform_4, window_bounds = array<i64: 1, 32>}, {pipeline_mode = #tpu.pipeline_mode<synchronous>, transform_indices = @transform_5, window_bounds = array<i64: 2, 8, 8>}]} {
    %c0 = arith.constant 0 : index
    %c0_0 = arith.constant 0 : index
    %0 = vector.load %arg1[%c0, %c0_0] : memref<8x32xf32, #tpu.memory_space<vmem>>, vector<8x32xf32>
    %c0_1 = arith.constant 0 : index
    %c0_2 = arith.constant 0 : index
    %1 = vector.load %arg4[%c0_1, %c0_2] : memref<1x32xf32, #tpu.memory_space<vmem>>, vector<1x32xf32>
    %c0_3 = arith.constant 0 : index
    %c0_4 = arith.constant 0 : index
    %2 = vector.load %arg5[%c0_3, %c0_4] : memref<1x32xf32, #tpu.memory_space<vmem>>, vector<1x32xf32>
    %cst = arith.constant dense<0.000000e+00> : vector<8xf32>
    %3 = vector.multi_reduction <add>, %0, %cst [1] : vector<8x32xf32> to vector<8xf32>
    %4 = vector.shape_cast %3 : vector<8xf32> to vector<8x1xf32>
    %cst_5 = arith.constant 3.200000e+01 : f32
    %5 = vector.broadcast %cst_5 : f32 to vector<8x1xf32>
    %6 = arith.divf %4, %5 : vector<8x1xf32>
    %7 = vector.broadcast %6 : vector<8x1xf32> to vector<8x32xf32>
    %8 = arith.subf %0, %7 : vector<8x32xf32>
    %9 = arith.mulf %8, %8 : vector<8x32xf32>
    %cst_6 = arith.constant dense<0.000000e+00> : vector<8xf32>
    %10 = vector.multi_reduction <add>, %9, %cst_6 [1] : vector<8x32xf32> to vector<8xf32>
    %11 = vector.shape_cast %10 : vector<8xf32> to vector<8x1xf32>
    %cst_7 = arith.constant 3.200000e+01 : f32
    %12 = vector.broadcast %cst_7 : f32 to vector<8x1xf32>
    %13 = arith.divf %11, %12 : vector<8x1xf32>
    %14 = vector.broadcast %6 : vector<8x1xf32> to vector<8x32xf32>
    %15 = arith.subf %0, %14 : vector<8x32xf32>
    %cst_8 = arith.constant 9.99999996E-13 : f32
    %16 = vector.broadcast %cst_8 : f32 to vector<8x1xf32>
    %17 = arith.addf %13, %16 : vector<8x1xf32>
    %18 = math.rsqrt %17 : vector<8x1xf32>
    %19 = vector.broadcast %18 : vector<8x1xf32> to vector<8x32xf32>
    %20 = arith.mulf %15, %19 : vector<8x32xf32>
    %21 = vector.broadcast %1 : vector<1x32xf32> to vector<8x32xf32>
    %22 = arith.mulf %20, %21 : vector<8x32xf32>
    %23 = vector.broadcast %2 : vector<1x32xf32> to vector<8x32xf32>
    %24 = arith.addf %22, %23 : vector<8x32xf32>
    %c0_9 = arith.constant 0 : index
    %c0_10 = arith.constant 0 : index
    %25 = vector.load %arg2[%c0_9, %c0_10] : memref<32x64xf32, #tpu.memory_space<vmem>>, vector<32x64xf32>
    %cst_11 = arith.constant dense<0.000000e+00> : vector<8x64xf32>
    %26 = tpu.matmul %24, %25, %cst_11 {dimension_numbers = #tpu.dot_dimension_numbers<[1], [0], [0], [1], [0, 0, 1, 1], [], []>} : vector<8x32xf32>, vector<32x64xf32>, vector<8x64xf32> -> vector<8x64xf32>
    %c0_12 = arith.constant 0 : index
    %c0_13 = arith.constant 0 : index
    %27 = vector.load %arg3[%c0_12, %c0_13] : memref<1x64xf32, #tpu.memory_space<vmem>>, vector<1x64xf32>
    %28 = vector.broadcast %27 : vector<1x64xf32> to vector<8x64xf32>
    %29 = arith.addf %26, %28 : vector<8x64xf32>
    %30 = vector.extract_strided_slice %29 {offsets = [0, 0], sizes = [8, 32], strides = [1, 1]} : vector<8x64xf32> to vector<8x32xf32>
    %31 = vector.shape_cast %30 : vector<8x32xf32> to vector<8x2x16xf32>
    %32 = tpu.transpose %31, [1, 0, 2] : vector<8x2x16xf32> -> vector<2x8x16xf32>
    %33 = vector.extract_strided_slice %29 {offsets = [0, 32], sizes = [8, 32], strides = [1, 1]} : vector<8x64xf32> to vector<8x32xf32>
    %34 = vector.shape_cast %33 : vector<8x32xf32> to vector<8x2x16xf32>
    %35 = tpu.transpose %34, [1, 0, 2] : vector<8x2x16xf32> -> vector<2x8x16xf32>
    "tpu.trace_start"() <{level = 10 : i32, message = "hqd,hkd->hqk"}> : () -> ()
    %cst_14 = arith.constant dense<0.000000e+00> : vector<2x8x8xf32>
    %36 = tpu.matmul %32, %35, %cst_14 {dimension_numbers = #tpu.dot_dimension_numbers<[2], [2], [1], [1], [0, 0, 0, 1, 1, 1], [0], [0]>} : vector<2x8x16xf32>, vector<2x8x16xf32>, vector<2x8x8xf32> -> vector<2x8x8xf32>
    "tpu.trace_stop"() : () -> ()
    %cst_15 = arith.constant dense<0xFF800000> : vector<2x8xf32>
    %37 = vector.multi_reduction <maximumf>, %36, %cst_15 [2] : vector<2x8x8xf32> to vector<2x8xf32>
    %38 = vector.shape_cast %37 : vector<2x8xf32> to vector<2x8x1xf32>
    %39 = vector.broadcast %38 : vector<2x8x1xf32> to vector<2x8x8xf32>
    %40 = arith.subf %36, %39 : vector<2x8x8xf32>
    %41 = math.exp %40 : vector<2x8x8xf32>
    %cst_16 = arith.constant dense<0.000000e+00> : vector<2x8xf32>
    %42 = vector.multi_reduction <add>, %41, %cst_16 [2] : vector<2x8x8xf32> to vector<2x8xf32>
    %43 = vector.shape_cast %42 : vector<2x8xf32> to vector<2x8x1xf32>
    %44 = tpu.reciprocal %43 {approx = true} : vector<2x8x1xf32> -> vector<2x8x1xf32>
    %45 = vector.broadcast %44 : vector<2x8x1xf32> to vector<2x8x8xf32>
    %46 = arith.mulf %41, %45 : vector<2x8x8xf32>
    %47 = arith.truncf %46 : vector<2x8x8xf32> to vector<2x8x8xbf16>
    %c0_17 = arith.constant 0 : index
    %c0_18 = arith.constant 0 : index
    %c0_19 = arith.constant 0 : index
    %48 = vector.load %arg6[%c0_17, %c0_18, %c0_19] : memref<2x8x8xbf16, #tpu.memory_space<vmem>>, vector<2x8x8xbf16>
    tpu.vector_store %arg6[%c0_17, %c0_18, %c0_19], %47 {strides = array<i32>} : memref<2x8x8xbf16, #tpu.memory_space<vmem>>, vector<2x8x8xbf16>,
    return
  }
  func.func @transform_0(%arg0: i32) -> (i32, i32) {
    %c0_i32 = arith.constant 0 : i32
    %c0_i32_0 = arith.constant 0 : i32
    %c0_i32_1 = arith.constant 0 : i32
    return %c0_i32, %c0_i32_0 : i32, i32
  }
  func.func @transform_1(%arg0: i32) -> (i32, i32) {
    %c0_i32 = arith.constant 0 : i32
    %c0_i32_0 = arith.constant 0 : i32
    %c0_i32_1 = arith.constant 0 : i32
    return %c0_i32, %c0_i32_0 : i32, i32
  }
  func.func @transform_2(%arg0: i32) -> (i32, i32) {
    %c0_i32 = arith.constant 0 : i32
    %c0_i32_0 = arith.constant 0 : i32
    %c0_i32_1 = arith.constant 0 : i32
    return %c0_i32, %c0_i32_0 : i32, i32
  }
  func.func @transform_3(%arg0: i32) -> (i32, i32) {
    %c0_i32 = arith.constant 0 : i32
    %c0_i32_0 = arith.constant 0 : i32
    %c0_i32_1 = arith.constant 0 : i32
    return %c0_i32, %c0_i32_0 : i32, i32
  }
  func.func @transform_4(%arg0: i32) -> (i32, i32) {
    %c0_i32 = arith.constant 0 : i32
    %c0_i32_0 = arith.constant 0 : i32
    %c0_i32_1 = arith.constant 0 : i32
    return %c0_i32, %c0_i32_0 : i32, i32
  }
  func.func @transform_5(%arg0: i32) -> (i32, i32, i32) {
    %c0_i32 = arith.constant 0 : i32
    %c0_i32_0 = arith.constant 0 : i32
    %c0_i32_1 = arith.constant 0 : i32
    %c0_i32_2 = arith.constant 0 : i32
    return %c0_i32, %c0_i32_0, %c0_i32_1 : i32, i32, i32
  }
}

</mosaic_0001>

<llo_original>
// kernel: tpu_custom_call.1
$region0: #{tpu_custom_call.1}
  #allocation0 [shape = 'u32[]', space=smem, size = 0x4, offset = 0x4, fixed_abs, tag = 'smem constant byte address 0x4 - core index']
  #allocation1 [shape = 'u32[144,128]{1,0:T(1,128)}', space=vmem, size = 0x12000, scoped, tag = 'internal scratch']
  %s0 = inlined_call_operand.hbm [shape: f32[8,32], index: 0, kind: input, shape index: {}]
  %s1 = inlined_call_operand.hbm [shape: f32[32,64], index: 1, kind: input, shape index: {}]
  %s2 = inlined_call_operand.vmem [shape: f32[1,64], index: 2, kind: input, shape index: {}]
  %s3 = inlined_call_operand.vmem [shape: f32[1,32], index: 3, kind: input, shape index: {}]
  %s4 = inlined_call_operand.vmem [shape: f32[1,32], index: 4, kind: input, shape index: {}]
  %s5 = inlined_call_operand.hbm [shape: bf16[2,8,8], index: 5, kind: output, shape index: {}]
  %s6 = sld [smem:[#allocation0]]
  $region38: #{tpu_custom_call.1} parent=0
    _
  %s8 = ssub.s32 1, %s6
  %s9 = scalar_select 0, %s8, %s6
  $region1: #{tpu_custom_call.1} parent=0
    #allocation2 [shape = 'u8[4096]{0}', space=vmem, size = 0x1000, scoped, tag = 'input window, operand 0, single buffered']
    #allocation3 [shape = 's32[1]{0}', space=sflag, size = 0x4, scoped, tag = 'scoped memory for tpu_custom_call.1']
    #allocation4 [shape = 's32[1]{0}', space=sflag, size = 0x4, scoped, tag = 'scoped memory for tpu_custom_call.1']
    #allocation5 [shape = 'u8[16384]{0}', space=vmem, size = 0x4000, scoped, tag = 'input window, operand 1, single buffered']
    #allocation6 [shape = 's32[1]{0}', space=sflag, size = 0x4, scoped, tag = 'scoped memory for tpu_custom_call.1']
    #allocation7 [shape = 'u8[4096]{0}', space=vmem, size = 0x1000, scoped, tag = 'output window, operand 0, single buffered']
    %10 = vsyncpa [#allocation3], 0
    %11 = vsyncpa [#allocation6], 0
    %12 = vsyncpa [#allocation4], 0
    // Predicated region
    $region2: #{tpu_custom_call.1} parent=1 // pred_check
      _
    $region3: #{tpu_custom_call.1} parent=1 // pred_check_branch
      %14 = sbr.rel (0) target = $region5
    $region4: #{tpu_custom_call.1} parent=1 // pred_region
      %s16 = ssub.s32 128, 128
      %17 = vsyncadd [#allocation3], %s16
      %s19 = sshll.u32 [#allocation2], 4
      %s20 = int_to_ptr.vmem [resolvable:$true] %s19
      %22 = dma.hbm_to_vmem [thread:$0]  %s0, 128, %s20, [#allocation3]
    $region5: #{tpu_custom_call.1} parent=1 // pred_fallthru
      _
    // Predicated region
    $region6: #{tpu_custom_call.1} parent=1 // pred_check
      _
    $region7: #{tpu_custom_call.1} parent=1 // pred_check_branch
      %24 = sbr.rel (0) target = $region9
    $region8: #{tpu_custom_call.1} parent=1 // pred_region
      %s26 = ssub.s32 512, 512
      %27 = vsyncadd [#allocation6], %s26
      %s28 = sshll.u32 [#allocation5], 4
      %s29 = int_to_ptr.vmem [resolvable:$true] %s28
      %34 = dma.hbm_to_vmem [thread:$0]  %s1, 512, %s29, [#allocation6], 128, 128, 8
    $region9: #{tpu_custom_call.1} parent=1 // pred_fallthru
      _
    // Predicated region
    $region10: #{tpu_custom_call.1} parent=1 // pred_check
      _
    $region11: #{tpu_custom_call.1} parent=1 // pred_check_branch
      %36 = sbr.rel (0) target = $region13
    $region12: #{tpu_custom_call.1} parent=1 // pred_region
      _
    $region13: #{tpu_custom_call.1} parent=1 // pred_fallthru
      _
    // Predicated region
    $region14: #{tpu_custom_call.1} parent=1 // pred_check
      _
    $region15: #{tpu_custom_call.1} parent=1 // pred_check_branch
      %38 = sbr.rel (0) target = $region17
    $region16: #{tpu_custom_call.1} parent=1 // pred_region
      _
    $region17: #{tpu_custom_call.1} parent=1 // pred_fallthru
      _
    // Predicated region
    $region18: #{tpu_custom_call.1} parent=1 // pred_check
      _
    $region19: #{tpu_custom_call.1} parent=1 // pred_check_branch
      %40 = sbr.rel (0) target = $region21
    $region20: #{tpu_custom_call.1} parent=1 // pred_region
      _
    $region21: #{tpu_custom_call.1} parent=1 // pred_fallthru
      _
    // Predicated region
    $region22: #{tpu_custom_call.1} parent=1 // pred_check
      _
    $region23: #{tpu_custom_call.1} parent=1 // pred_check_branch
      %42 = sbr.rel (0) target = $region25
    $region24: #{tpu_custom_call.1} parent=1 // pred_region
      %43 = dma.done [#allocation3], 128
    $region25: #{tpu_custom_call.1} parent=1 // pred_fallthru
      _
    // Predicated region
    $region26: #{tpu_custom_call.1} parent=1 // pred_check
      _
    $region27: #{tpu_custom_call.1} parent=1 // pred_check_branch
      %45 = sbr.rel (0) target = $region29
    $region28: #{tpu_custom_call.1} parent=1 // pred_region
      %46 = dma.done [#allocation6], 512
    $region29: #{tpu_custom_call.1} parent=1 // pred_fallthru
      _
    %v47 = vld [vmem:[#allocation2] sm:$0xff]
    %v48 = vld [vmem:[%s3] sm:$0x1]
    %v49 = vld [vmem:[%s4] sm:$0x1]
    %vm50 = vcmask 261120
    %v51 = vsel %vm50, %v47, 0.0
    %52 = vadd.xlane.f32.xlu0 %v51
    %v53 = vpop.xlane.xlu0 %52
    %v54 = vrcp.pop 32.0
    %v55 = vmul.f32 %v53, %v54
    %v56 = vsub.f32 %v47, %v55
    %v57 = vmul.f32 %v56, %v56
    %v58 = vsel %vm50, %v57, 0.0
    %59 = vadd.xlane.f32.xlu0 %v58
    %v60 = vpop.xlane.xlu0 %59
    %v61 = vmul.f32 %v60, %v54
    %v62 = vadd.f32 %v61, 1e-12
    %v63 = vrsqrt.pop %v62
    %v64 = vmul.f32 %v56, %v63
    %v66 = vlaneseq
    %v67 = vshrl.u32 %v66, 7
    %v68 = vsub.s32 0, %v67
    %v69 = vrot.slane %v48, %v68
    %v71 = vmul.f32 %v64, %v69
    %v73 = vlaneseq
    %v74 = vshrl.u32 %v73, 7
    %v75 = vsub.s32 0, %v74
    %v76 = vrot.slane %v49, %v75
    %v78 = vadd.f32 %v71, %v76
    %v79 = vld [vmem:[#allocation5] sm:$0xff]
    %v80 = vld [vmem:[#allocation5 + $0x8] sm:$0xff]
    %v81 = vld [vmem:[#allocation5 + $0x10] sm:$0xff]
    %v82 = vld [vmem:[#allocation5 + $0x18] sm:$0xff]
    %v83 = vld [vmem:[%s2] sm:$0x1]
    %v85 = vlaneseq
    %v86 = vshrl.u32 %v85, 7
    %v87 = vsub.s32 0, %v86
    %v88 = vrot.slane %v83, %v87
    %v91 = vsel %vm50, %v78, 0
    %93 = vmatprep.subr.mxu0 0.0
    %94 = vmatpush1.msra.mxu0 %v79
    %95 = vmatprep.subr.mxu0 0.0
    %96 = vmatpush1.msra.mxu0 %v80
    %97 = vmatprep.subr.mxu0 0.0
    %98 = vmatpush1.msra.mxu0 %v81
    %99 = vmatprep.subr.mxu0 0.0
    %100 = vmatpush1.msra.mxu0 %v82
    %101 = vmatprep.subr.mxu0 0.0
    %102 = vmatpush1.msra.mxu0 0.0
    %103 = vmatprep.subr.mxu0 0.0
    %104 = vmatpush1.msra.mxu0 0.0
    %105 = vmatprep.subr.mxu0 0.0
    %106 = vmatpush1.msra.mxu0 0.0
    %107 = vmatprep.subr.mxu0 0.0
    %108 = vmatpush1.msra.mxu0 0.0
    %109 = vmatprep.subr.mxu0 0.0
    %110 = vmatpush1.msra.mxu0 0.0
    %111 = vmatprep.subr.mxu0 0.0
    %112 = vmatpush1.msra.mxu0 0.0
    %113 = vmatprep.subr.mxu0 0.0
    %114 = vmatpush1.msra.mxu0 0.0
    %115 = vmatprep.subr.mxu0 0.0
    %116 = vmatpush1.msra.mxu0 0.0
    %117 = vmatprep.subr.mxu0 0.0
    %118 = vmatpush1.msra.mxu0 0.0
    %119 = vmatprep.subr.mxu0 0.0
    %120 = vmatpush1.msra.mxu0 0.0
    %121 = vmatprep.subr.mxu0 0.0
    %122 = vmatpush1.msra.mxu0 0.0
    %123 = vmatprep.subr.mxu0 0.0
    %124 = vmatpush1.msra.mxu0 0.0
    %125 = vmatprep.subr.mxu0 0.0
    %126 = vmatpush1.msra.mxu0 0.0
    %127 = vmatprep.subr.mxu0 0.0
    %128 = vmatpush1.msra.mxu0 0.0
    %129 = vmatprep.subr.mxu0 0.0
    %130 = vmatpush1.msra.mxu0 0.0
    %131 = vmatprep.subr.mxu0 0.0
    %132 = vmatpush1.msra.mxu0 0.0
    %133 = vmatprep.subr.mxu0 0.0
    %134 = vmatpush1.msra.mxu0 0.0
    %135 = vmatprep.subr.mxu0 0.0
    %136 = vmatpush1.msra.mxu0 0.0
    %137 = vmatprep.subr.mxu0 0.0
    %138 = vmatpush1.msra.mxu0 0.0
    %139 = vmatprep.subr.mxu0 0.0
    %140 = vmatpush1.msra.mxu0 0.0
    %141 = vmatprep.subr.mxu0 0.0
    %142 = vmatpush1.msra.mxu0 0.0
    %143 = vmatprep.subr.mxu0 0.0
    %144 = vmatpush1.msra.mxu0 0.0
    %145 = vmatprep.subr.mxu0 0.0
    %146 = vmatpush1.msra.mxu0 0.0
    %147 = vmatprep.subr.mxu0 0.0
    %148 = vmatpush1.msra.mxu0 0.0
    %149 = vmatprep.subr.mxu0 0.0
    %150 = vmatpush1.msra.mxu0 0.0
    %151 = vmatprep.subr.mxu0 0.0
    %152 = vmatpush1.msra.mxu0 0.0
    %153 = vmatprep.subr.mxu0 0.0
    %154 = vmatpush1.msra.mxu0 0.0
    %155 = vmatprep.subr.mxu0 0.0
    %156 = vmatpush1.msra.mxu0 0.0
    %157 = vmatprep.mubr.f32.mxu0 0.0
    %158 = vmatmul.mubr.f32.gmra.mrb[0].mxu0 %v91
    %v159 = vpop.f32.mrb[0].mxu0
    %v160 = vadd.f32 %v88, %v159
    %v161 = vpop.f32.mrb[0].mxu0
    %162 = vdwg.mxu0
    %164 = vrot.lane.b32.xlu0 %v160, 112
    %v165 = vpop.permute.xlu0 %164
    %v167 = vcombine.high %v160, 0.0
    %v169 = vunpack.c.l.s4 1983009808
    %v170 = vunpack.c.0.s8 %v169
    %v171 = vlaneseq
    %v172 = vshrl.u32 %v171, 7
    %v173 = vsub.s32 %v170, %v172
    %v174 = vrot.slane %v160, %v173
    %v176 = vunpack.c.l.s4 1983009808
    %v177 = vunpack.c.0.s8 %v176
    %v178 = vlaneseq
    %v179 = vshrl.u32 %v178, 7
    %v180 = vsub.s32 %v177, %v179
    %v181 = vrot.slane %v167, %v180
    %v182 = vcombine.high %v165, 0.0
    %v184 = vunpack.c.l.s4 1983009808
    %v185 = vunpack.c.0.s8 %v184
    %v186 = vlaneseq
    %v187 = vshrl.u32 %v186, 7
    %v188 = vsub.s32 %v185, %v187
    %v189 = vrot.slane %v165, %v188
    %v191 = vunpack.c.l.s4 1983009808
    %v192 = vunpack.c.0.s8 %v191
    %v193 = vlaneseq
    %v194 = vshrl.u32 %v193, 7
    %v195 = vsub.s32 %v192, %v194
    %v196 = vrot.slane %v182, %v195
    %v197 = vcombine.low %v174, %v189
    %v198 = vcombine.high %v174, %v189
    %v200 = vunpack.c.l.s4 1934713408
    %v201 = vunpack.c.0.s8 %v200
    %v202 = vlaneseq
    %v203 = vshrl.u32 %v202, 7
    %v204 = vsub.s32 %v201, %v203
    %v205 = vrot.slane %v197, %v204
    %v207 = vunpack.c.l.s4 1934713408
    %v208 = vunpack.c.0.s8 %v207
    %v209 = vlaneseq
    %v210 = vshrl.u32 %v209, 7
    %v211 = vsub.s32 %v208, %v210
    %v212 = vrot.slane %v198, %v211
    %v213 = vcombine.low %v181, %v196
    %v214 = vcombine.high %v181, %v196
    %v216 = vunpack.c.l.s4 1934713408
    %v217 = vunpack.c.0.s8 %v216
    %v218 = vlaneseq
    %v219 = vshrl.u32 %v218, 7
    %v220 = vsub.s32 %v217, %v219
    %v221 = vrot.slane %v213, %v220
    %v223 = vunpack.c.l.s4 1934713408
    %v224 = vunpack.c.0.s8 %v223
    %v225 = vlaneseq
    %v226 = vshrl.u32 %v225, 7
    %v227 = vsub.s32 %v224, %v226
    %v228 = vrot.slane %v214, %v227
    %v229 = vcombine.high %v205, 0.0
    %v230 = vcombine.high %v212, 0.0
    %v231 = vcombine.high %v221, 0.0
    %v232 = vcombine.high %v228, 0.0
    %v233 = vcombine.low %v205, %v212
    %v235 = vunpack.c.l.s4 1983009808
    %v236 = vunpack.c.0.s8 %v235
    %v237 = vlaneseq
    %v238 = vshrl.u32 %v237, 7
    %v239 = vsub.s32 %v236, %v238
    %v240 = vrot.slane %v233, %v239
    %v241 = vcombine.low %v229, %v230
    %v243 = vunpack.c.l.s4 1983009808
    %v244 = vunpack.c.0.s8 %v243
    %v245 = vlaneseq
    %v246 = vshrl.u32 %v245, 7
    %v247 = vsub.s32 %v244, %v246
    %v248 = vrot.slane %v241, %v247
    %v249 = vcombine.low %v221, %v228
    %v251 = vunpack.c.l.s4 1983009808
    %v252 = vunpack.c.0.s8 %v251
    %v253 = vlaneseq
    %v254 = vshrl.u32 %v253, 7
    %v255 = vsub.s32 %v252, %v254
    %v256 = vrot.slane %v249, %v255
    %v257 = vcombine.low %v231, %v232
    %v259 = vunpack.c.l.s4 1983009808
    %v260 = vunpack.c.0.s8 %v259
    %v261 = vlaneseq
    %v262 = vshrl.u32 %v261, 7
    %v263 = vsub.s32 %v260, %v262
    %v264 = vrot.slane %v257, %v263
    %v265 = vcombine.low %v240, %v248
    %v267 = vunpack.c.l.s4 1934713408
    %v268 = vunpack.c.0.s8 %v267
    %v269 = vlaneseq
    %v270 = vshrl.u32 %v269, 7
    %v271 = vsub.s32 %v268, %v270
    %v272 = vrot.slane %v265, %v271
    %v273 = vcombine.low %v256, %v264
    %v275 = vunpack.c.l.s4 1934713408
    %v276 = vunpack.c.0.s8 %v275
    %v277 = vlaneseq
    %v278 = vshrl.u32 %v277, 7
    %v279 = vsub.s32 %v276, %v278
    %v280 = vrot.slane %v273, %v279
    %v281 = vcombine.low %v272, %v280
    %v282 = vcombine.high %v272, %v280
    %283 = vrot.lane.b32.xlu0 %v160, 96
    %v284 = vpop.permute.xlu0 %283
    %285 = vrot.lane.b32.xlu0 %v165, 96
    %v286 = vpop.permute.xlu0 %285
    %v289 = vcombine.high %v284, 0.0
    %v291 = vunpack.c.l.s4 1983009808
    %v292 = vunpack.c.0.s8 %v291
    %v293 = vlaneseq
    %v294 = vshrl.u32 %v293, 7
    %v295 = vsub.s32 %v292, %v294
    %v296 = vrot.slane %v284, %v295
    %v298 = vunpack.c.l.s4 1983009808
    %v299 = vunpack.c.0.s8 %v298
    %v300 = vlaneseq
    %v301 = vshrl.u32 %v300, 7
    %v302 = vsub.s32 %v299, %v301
    %v303 = vrot.slane %v289, %v302
    %v304 = vcombine.high %v286, 0.0
    %v306 = vunpack.c.l.s4 1983009808
    %v307 = vunpack.c.0.s8 %v306
    %v308 = vlaneseq
    %v309 = vshrl.u32 %v308, 7
    %v310 = vsub.s32 %v307, %v309
    %v311 = vrot.slane %v286, %v310
    %v313 = vunpack.c.l.s4 1983009808
    %v314 = vunpack.c.0.s8 %v313
    %v315 = vlaneseq
    %v316 = vshrl.u32 %v315, 7
    %v317 = vsub.s32 %v314, %v316
    %v318 = vrot.slane %v304, %v317
    %v319 = vcombine.low %v296, %v311
    %v320 = vcombine.high %v296, %v311
    %v322 = vunpack.c.l.s4 1934713408
    %v323 = vunpack.c.0.s8 %v322
    %v324 = vlaneseq
    %v325 = vshrl.u32 %v324, 7
    %v326 = vsub.s32 %v323, %v325
    %v327 = vrot.slane %v319, %v326
    %v329 = vunpack.c.l.s4 1934713408
    %v330 = vunpack.c.0.s8 %v329
    %v331 = vlaneseq
    %v332 = vshrl.u32 %v331, 7
    %v333 = vsub.s32 %v330, %v332
    %v334 = vrot.slane %v320, %v333
    %v335 = vcombine.low %v303, %v318
    %v336 = vcombine.high %v303, %v318
    %v338 = vunpack.c.l.s4 1934713408
    %v339 = vunpack.c.0.s8 %v338
    %v340 = vlaneseq
    %v341 = vshrl.u32 %v340, 7
    %v342 = vsub.s32 %v339, %v341
    %v343 = vrot.slane %v335, %v342
    %v345 = vunpack.c.l.s4 1934713408
    %v346 = vunpack.c.0.s8 %v345
    %v347 = vlaneseq
    %v348 = vshrl.u32 %v347, 7
    %v349 = vsub.s32 %v346, %v348
    %v350 = vrot.slane %v336, %v349
    %v351 = vcombine.high %v327, 0.0
    %v352 = vcombine.high %v334, 0.0
    %v353 = vcombine.high %v343, 0.0
    %v354 = vcombine.high %v350, 0.0
    %v355 = vcombine.low %v327, %v334
    %v357 = vunpack.c.l.s4 1983009808
    %v358 = vunpack.c.0.s8 %v357
    %v359 = vlaneseq
    %v360 = vshrl.u32 %v359, 7
    %v361 = vsub.s32 %v358, %v360
    %v362 = vrot.slane %v355, %v361
    %v363 = vcombine.low %v351, %v352
    %v365 = vunpack.c.l.s4 1983009808
    %v366 = vunpack.c.0.s8 %v365
    %v367 = vlaneseq
    %v368 = vshrl.u32 %v367, 7
    %v369 = vsub.s32 %v366, %v368
    %v370 = vrot.slane %v363, %v369
    %v371 = vcombine.low %v343, %v350
    %v373 = vunpack.c.l.s4 1983009808
    %v374 = vunpack.c.0.s8 %v373
    %v375 = vlaneseq
    %v376 = vshrl.u32 %v375, 7
    %v377 = vsub.s32 %v374, %v376
    %v378 = vrot.slane %v371, %v377
    %v379 = vcombine.low %v353, %v354
    %v381 = vunpack.c.l.s4 1983009808
    %v382 = vunpack.c.0.s8 %v381
    %v383 = vlaneseq
    %v384 = vshrl.u32 %v383, 7
    %v385 = vsub.s32 %v382, %v384
    %v386 = vrot.slane %v379, %v385
    %v387 = vcombine.low %v362, %v370
    %v389 = vunpack.c.l.s4 1934713408
    %v390 = vunpack.c.0.s8 %v389
    %v391 = vlaneseq
    %v392 = vshrl.u32 %v391, 7
    %v393 = vsub.s32 %v390, %v392
    %v394 = vrot.slane %v387, %v393
    %v395 = vcombine.low %v378, %v386
    %v397 = vunpack.c.l.s4 1934713408
    %v398 = vunpack.c.0.s8 %v397
    %v399 = vlaneseq
    %v400 = vshrl.u32 %v399, 7
    %v401 = vsub.s32 %v398, %v400
    %v402 = vrot.slane %v395, %v401
    %v403 = vcombine.low %v394, %v402
    %v404 = vcombine.high %v394, %v402
    %vm405 = vcmask 130048
    %v407 = vsel %vm405, %v281, 0
    %v410 = vsel %vm405, %v403, 0
    %412 = vmatprep.subr.mxu0 0.0
    %413 = vmatpush1.xpose.msra.mxu0 %v410
    %414 = vmatprep.subr.mxu0 0.0
    %415 = vmatpush1.xpose.msra.mxu0 0.0
    %416 = vmatprep.subr.mxu0 0.0
    %417 = vmatpush1.xpose.msra.mxu0 0.0
    %418 = vmatprep.subr.mxu0 0.0
    %419 = vmatpush1.xpose.msra.mxu0 0.0
    %420 = vmatprep.subr.mxu0 0.0
    %421 = vmatpush1.xpose.msra.mxu0 0.0
    %422 = vmatprep.subr.mxu0 0.0
    %423 = vmatpush1.xpose.msra.mxu0 0.0
    %424 = vmatprep.subr.mxu0 0.0
    %425 = vmatpush1.xpose.msra.mxu0 0.0
    %426 = vmatprep.subr.mxu0 0.0
    %427 = vmatpush1.xpose.msra.mxu0 0.0
    %428 = vmatprep.subr.mxu0 0.0
    %429 = vmatpush1.xpose.msra.mxu0 0.0
    %430 = vmatprep.subr.mxu0 0.0
    %431 = vmatpush1.xpose.msra.mxu0 0.0
    %432 = vmatprep.subr.mxu0 0.0
    %433 = vmatpush1.xpose.msra.mxu0 0.0
    %434 = vmatprep.subr.mxu0 0.0
    %435 = vmatpush1.xpose.msra.mxu0 0.0
    %436 = vmatprep.subr.mxu0 0.0
    %437 = vmatpush1.xpose.msra.mxu0 0.0
    %438 = vmatprep.subr.mxu0 0.0
    %439 = vmatpush1.xpose.msra.mxu0 0.0
    %440 = vmatprep.subr.mxu0 0.0
    %441 = vmatpush1.xpose.msra.mxu0 0.0
    %442 = vmatprep.subr.mxu0 0.0
    %443 = vmatpush1.xpose.msra.mxu0 0.0
    %444 = vmatprep.subr.mxu0 0.0
    %445 = vmatpush1.xpose.msra.mxu0 0.0
    %446 = vmatprep.subr.mxu0 0.0
    %447 = vmatpush1.xpose.msra.mxu0 0.0
    %448 = vmatprep.subr.mxu0 0.0
    %449 = vmatpush1.xpose.msra.mxu0 0.0
    %450 = vmatprep.subr.mxu0 0.0
    %451 = vmatpush1.xpose.msra.mxu0 0.0
    %452 = vmatprep.subr.mxu0 0.0
    %453 = vmatpush1.xpose.msra.mxu0 0.0
    %454 = vmatprep.subr.mxu0 0.0
    %455 = vmatpush1.xpose.msra.mxu0 0.0
    %456 = vmatprep.subr.mxu0 0.0
    %457 = vmatpush1.xpose.msra.mxu0 0.0
    %458 = vmatprep.subr.mxu0 0.0
    %459 = vmatpush1.xpose.msra.mxu0 0.0
    %460 = vmatprep.subr.mxu0 0.0
    %461 = vmatpush1.xpose.msra.mxu0 0.0
    %462 = vmatprep.subr.mxu0 0.0
    %463 = vmatpush1.xpose.msra.mxu0 0.0
    %464 = vmatprep.subr.mxu0 0.0
    %465 = vmatpush1.xpose.msra.mxu0 0.0
    %466 = vmatprep.subr.mxu0 0.0
    %467 = vmatpush1.xpose.msra.mxu0 0.0
    %468 = vmatprep.subr.mxu0 0.0
    %469 = vmatpush1.xpose.msra.mxu0 0.0
    %470 = vmatprep.subr.mxu0 0.0
    %471 = vmatpush1.xpose.msra.mxu0 0.0
    %472 = vmatprep.subr.mxu0 0.0
    %473 = vmatpush1.xpose.msra.mxu0 0.0
    %474 = vmatprep.subr.mxu0 0.0
    %475 = vmatpush1.xpose.msra.mxu0 0.0
    %476 = vmatprep.mubr.f32.mxu0 0.0
    %477 = vmatmul.mubr.f32.gmra.mrb[0].mxu0 %v407
    %v478 = vpop.f32.mrb[0].mxu0
    %v479 = vadd.f32 0.0, %v478
    %v480 = vpop.f32.mrb[0].mxu0
    %481 = vdwg.mxu0
    %v483 = vsel %vm405, %v282, 0
    %v486 = vsel %vm405, %v404, 0
    %488 = vmatprep.subr.mxu0 0.0
    %489 = vmatpush1.xpose.msra.mxu0 %v486
    %490 = vmatprep.subr.mxu0 0.0
    %491 = vmatpush1.xpose.msra.mxu0 0.0
    %492 = vmatprep.subr.mxu0 0.0
    %493 = vmatpush1.xpose.msra.mxu0 0.0
    %494 = vmatprep.subr.mxu0 0.0
    %495 = vmatpush1.xpose.msra.mxu0 0.0
    %496 = vmatprep.subr.mxu0 0.0
    %497 = vmatpush1.xpose.msra.mxu0 0.0
    %498 = vmatprep.subr.mxu0 0.0
    %499 = vmatpush1.xpose.msra.mxu0 0.0
    %500 = vmatprep.subr.mxu0 0.0
    %501 = vmatpush1.xpose.msra.mxu0 0.0
    %502 = vmatprep.subr.mxu0 0.0
    %503 = vmatpush1.xpose.msra.mxu0 0.0
    %504 = vmatprep.subr.mxu0 0.0
    %505 = vmatpush1.xpose.msra.mxu0 0.0
    %506 = vmatprep.subr.mxu0 0.0
    %507 = vmatpush1.xpose.msra.mxu0 0.0
    %508 = vmatprep.subr.mxu0 0.0
    %509 = vmatpush1.xpose.msra.mxu0 0.0
    %510 = vmatprep.subr.mxu0 0.0
    %511 = vmatpush1.xpose.msra.mxu0 0.0
    %512 = vmatprep.subr.mxu0 0.0
    %513 = vmatpush1.xpose.msra.mxu0 0.0
    %514 = vmatprep.subr.mxu0 0.0
    %515 = vmatpush1.xpose.msra.mxu0 0.0
    %516 = vmatprep.subr.mxu0 0.0
    %517 = vmatpush1.xpose.msra.mxu0 0.0
    %518 = vmatprep.subr.mxu0 0.0
    %519 = vmatpush1.xpose.msra.mxu0 0.0
    %520 = vmatprep.subr.mxu0 0.0
    %521 = vmatpush1.xpose.msra.mxu0 0.0
    %522 = vmatprep.subr.mxu0 0.0
    %523 = vmatpush1.xpose.msra.mxu0 0.0
    %524 = vmatprep.subr.mxu0 0.0
    %525 = vmatpush1.xpose.msra.mxu0 0.0
    %526 = vmatprep.subr.mxu0 0.0
    %527 = vmatpush1.xpose.msra.mxu0 0.0
    %528 = vmatprep.subr.mxu0 0.0
    %529 = vmatpush1.xpose.msra.mxu0 0.0
    %530 = vmatprep.subr.mxu0 0.0
    %531 = vmatpush1.xpose.msra.mxu0 0.0
    %532 = vmatprep.subr.mxu0 0.0
    %533 = vmatpush1.xpose.msra.mxu0 0.0
    %534 = vmatprep.subr.mxu0 0.0
    %535 = vmatpush1.xpose.msra.mxu0 0.0
    %536 = vmatprep.subr.mxu0 0.0
    %537 = vmatpush1.xpose.msra.mxu0 0.0
    %538 = vmatprep.subr.mxu0 0.0
    %539 = vmatpush1.xpose.msra.mxu0 0.0
    %540 = vmatprep.subr.mxu0 0.0
    %541 = vmatpush1.xpose.msra.mxu0 0.0
    %542 = vmatprep.subr.mxu0 0.0
    %543 = vmatpush1.xpose.msra.mxu0 0.0
    %544 = vmatprep.subr.mxu0 0.0
    %545 = vmatpush1.xpose.msra.mxu0 0.0
    %546 = vmatprep.subr.mxu0 0.0
    %547 = vmatpush1.xpose.msra.mxu0 0.0
    %548 = vmatprep.subr.mxu0 0.0
    %549 = vmatpush1.xpose.msra.mxu0 0.0
    %550 = vmatprep.subr.mxu0 0.0
    %551 = vmatpush1.xpose.msra.mxu0 0.0
    %552 = vmatprep.mubr.f32.mxu0 0.0
    %553 = vmatmul.mubr.f32.gmra.mrb[0].mxu0 %v483
    %v554 = vpop.f32.mrb[0].mxu0
    %v555 = vadd.f32 0.0, %v554
    %v556 = vpop.f32.mrb[0].mxu0
    %557 = vdwg.mxu0
    %vm558 = vcmask 64512
    %v559 = vsel %vm558, %v479, -inf
    %560 = vmax.xlane.f32.xlu0 %v559
    %v561 = vpop.xlane.xlu0 %560
    %v562 = vsel %vm558, %v555, -inf
    %563 = vmax.xlane.f32.xlu0 %v562
    %v564 = vpop.xlane.xlu0 %563
    %v565 = vsub.f32 %v479, %v561
    %v566 = vsub.f32 %v555, %v564
    %v567 = vmul.f32 %v565, 1.442695
    %v568 = vpow.pop %v567
    %v569 = vmul.f32 %v566, 1.442695
    %v570 = vpow.pop %v569
    %v571 = vsel %vm558, %v568, 0.0
    %572 = vadd.xlane.f32.xlu0 %v571
    %v573 = vpop.xlane.xlu0 %572
    %v574 = vsel %vm558, %v570, 0.0
    %575 = vadd.xlane.f32.xlu0 %v574
    %v576 = vpop.xlane.xlu0 %575
    %v577 = vrcp.pop %v573
    %v578 = vrcp.pop %v576
    %v579 = vmul.f32 %v568, %v577
    %v580 = vmul.f32 %v570, %v578
    %v581 = vpack.c.bf16 %v579, %v579
    %v582 = vpack.c.bf16 %v580, %v580
    %vm583 = vcmask 60416
    %584 = vst.msk [vmem:[#allocation7] sm:$0xf] %vm583, %v581
    %585 = vst.msk [vmem:[#allocation7 + $0x4] sm:$0xf] %vm583, %v582
    // Predicated region
    $region30: #{tpu_custom_call.1} parent=1 // pred_check
      _
    $region31: #{tpu_custom_call.1} parent=1 // pred_check_branch
      %587 = sbr.rel (0) target = $region33
    $region32: #{tpu_custom_call.1} parent=1 // pred_region
      %s589 = ssub.s32 128, 128
      %590 = vsyncadd [#allocation4], %s589
      %s591 = sshll.u32 [#allocation7], 4
      %s592 = int_to_ptr.vmem [resolvable:$true] %s591
      %597 = dma.vmem_to_hbm [thread:$0]  %s592, 128, %s5, [#allocation4], 64, 64, 4
    $region33: #{tpu_custom_call.1} parent=1 // pred_fallthru
      _
    // Predicated region
    $region34: #{tpu_custom_call.1} parent=1 // pred_check
      _
    $region35: #{tpu_custom_call.1} parent=1 // pred_check_branch
      %599 = sbr.rel (0) target = $region37
    $region36: #{tpu_custom_call.1} parent=1 // pred_region
      %600 = dma.done [#allocation4], 128
    $region37: #{tpu_custom_call.1} parent=1 // pred_fallthru
      _
    %601 = vsyncpa [#allocation3], 1
    %602 = vsyncpa [#allocation6], 1
    %603 = vsyncpa [#allocation4], 1

</llo_original>
